<compile_context>
chip_gen: v5e
topology: v5e:2x2
jax: 0.10.0
libtpu: 0.0.40
codegen_flags: <defaults>
</compile_context>

<pallas_src>
import jax
import jax.numpy as jnp
from jax.experimental import pallas as pl
from jax.experimental.pallas import tpu as pltpu

N_ACTIONS = 3 * 3          # 9
N_LAYERS = [256, 256]
N_STATES = 19

IN_PAD = 128               # fc1 input padded to one full lane width
OUT_PAD = 128              # output padded to one full lane width (lane-dense stores)
TM = 128                   # batch rows per grid step


def dqn_kernel(x_ref, w1_ref, b1_ref, w2_ref, b2_ref, w3_ref, b3_ref, o_ref):
    # x_ref: (TM, 128) bf16, w*: bf16, b*: f32, o_ref: (TM, 128) f32
    # fc1 + ReLU  (bf16 operands -> f32 accumulate, bias/ReLU in f32)
    h1 = jnp.dot(x_ref[...], w1_ref[...], preferred_element_type=jnp.float32)
    h1 = jnp.maximum(h1 + b1_ref[...], 0.0).astype(jnp.bfloat16)
    # fc2 + ReLU
    h2 = jnp.dot(h1, w2_ref[...], preferred_element_type=jnp.float32)
    h2 = jnp.maximum(h2 + b2_ref[...], 0.0).astype(jnp.bfloat16)
    # out (no activation) -> lane-dense (TM, 128) f32 store
    o_ref[...] = jnp.dot(h2, w3_ref[...], preferred_element_type=jnp.float32) + b3_ref[...]


def dqn_forward(x, params, *, tm=TM):
    """x: (B, N_STATES) f32.  params: f32 weights (in, out) + biases (1, out)."""
    w1, b1, w2, b2, w3, b3 = params
    B = x.shape[0]
    Bp = max(tm, ((B + tm - 1) // tm) * tm)          # pad batch to a multiple of TM

    # Lane-dense, bf16 operands (zero padding keeps the math identical).
    x_p = jnp.zeros((Bp, IN_PAD), jnp.bfloat16).at[:B, :N_STATES].set(x.astype(jnp.bfloat16))
    w1_p = jnp.zeros((IN_PAD, N_LAYERS[0]), jnp.bfloat16).at[:N_STATES, :].set(w1.astype(jnp.bfloat16))
    w2_b = w2.astype(jnp.bfloat16)
    w3_p = jnp.zeros((N_LAYERS[1], OUT_PAD), jnp.bfloat16).at[:, :N_ACTIONS].set(w3.astype(jnp.bfloat16))
    b3_p = jnp.zeros((1, OUT_PAD), jnp.float32).at[:, :N_ACTIONS].set(b3)

    grid = (Bp // tm,)
    out_padded = pl.pallas_call(
        dqn_kernel,
        out_shape=jax.ShapeDtypeStruct((Bp, OUT_PAD), jnp.float32),
        grid_spec=pltpu.PrefetchScalarGridSpec(
            num_scalar_prefetch=0,
            grid=grid,
            in_specs=[
                # batch tile marches with the grid
                pl.BlockSpec((tm, IN_PAD), lambda i: (i, 0)),
                # weights/biases: constant block index -> loaded once, VMEM-resident
                pl.BlockSpec((IN_PAD, N_LAYERS[0]), lambda i: (0, 0)),
                pl.BlockSpec((1, N_LAYERS[0]), lambda i: (0, 0)),
                pl.BlockSpec((N_LAYERS[0], N_LAYERS[1]), lambda i: (0, 0)),
                pl.BlockSpec((1, N_LAYERS[1]), lambda i: (0, 0)),
                pl.BlockSpec((N_LAYERS[1], OUT_PAD), lambda i: (0, 0)),
                pl.BlockSpec((1, OUT_PAD), lambda i: (0, 0)),
            ],
            out_specs=pl.BlockSpec((tm, OUT_PAD), lambda i: (i, 0)),
        ),
        compiler_params=pltpu.CompilerParams(
            dimension_semantics=("parallel",),       # v7x: shard batch tiles over 2 TCs
        ),
    )(x_p, w1_p, b1, w2_b, b2, w3_p, b3_p)

    return out_padded[:B, :N_ACTIONS]


def init_params(key):
    ks = jax.random.split(key, 6)
    # PyTorch: weight.data.normal_(0, 0.1); biases keep default Linear init
    # (uniform(-1/sqrt(fan_in), 1/sqrt(fan_in))) -- same distribution, not same RNG stream.
    w1 = (0.1 * jax.random.normal(ks[0], (N_STATES, N_LAYERS[0]))).astype(jnp.float32)
    b1 = (jax.random.uniform(ks[1], (1, N_LAYERS[0]), minval=-1.0, maxval=1.0)
          / jnp.sqrt(N_STATES)).astype(jnp.float32)
    w2 = (0.1 * jax.random.normal(ks[2], (N_LAYERS[0], N_LAYERS[1]))).astype(jnp.float32)
    b2 = (jax.random.uniform(ks[3], (1, N_LAYERS[1]), minval=-1.0, maxval=1.0)
          / jnp.sqrt(N_LAYERS[0])).astype(jnp.float32)
    w3 = (0.1 * jax.random.normal(ks[4], (N_LAYERS[1], N_ACTIONS))).astype(jnp.float32)
    b3 = (jax.random.uniform(ks[5], (1, N_ACTIONS), minval=-1.0, maxval=1.0)
          / jnp.sqrt(N_LAYERS[1])).astype(jnp.float32)
    return (w1, b1, w2, b2, w3, b3)


def reference_forward(x, params):
    """Matches the kernel's numerics: bf16 matmul operands, f32 accumulation/bias/ReLU."""
    w1, b1, w2, b2, w3, b3 = params
    xb = x.astype(jnp.bfloat16)
    h1 = jnp.maximum(
        jnp.dot(xb, w1.astype(jnp.bfloat16), preferred_element_type=jnp.float32) + b1, 0.0
    ).astype(jnp.bfloat16)
    h2 = jnp.maximum(
        jnp.dot(h1, w2.astype(jnp.bfloat16), preferred_element_type=jnp.float32) + b2, 0.0
    ).astype(jnp.bfloat16)
    return jnp.dot(h2, w3.astype(jnp.bfloat16), preferred_element_type=jnp.float32) + b3


if __name__ == "__main__":
    key = jax.random.PRNGKey(0)
    pkey, xkey = jax.random.split(key)
    params = init_params(pkey)

    # Batch that exercises both the grid (2 steps of TM=128) and the batch padding path.
    B = 200
    x = jax.random.normal(xkey, (B, N_STATES), dtype=jnp.float32)

    out = dqn_forward(x, params)
    out = jax.block_until_ready(out)

    ref = reference_forward(x, params)
    assert out.shape == (B, N_ACTIONS)
    assert jnp.allclose(out, ref, atol=1e-3, rtol=1e-3), (
        float(jnp.max(jnp.abs(out - ref)))
    )
    print("KERNEL_OK")
</pallas_src>

<mosaic_0001>
module attributes {stable_mosaic.version = 11 : i64} {
  func.func @dqn_kernel(%arg0: i32, %arg1: memref<128x128xbf16, #tpu.memory_space<vmem>>, %arg2: memref<128x256xbf16, #tpu.memory_space<vmem>>, %arg3: memref<1x256xf32, #tpu.memory_space<vmem>>, %arg4: memref<256x256xbf16, #tpu.memory_space<vmem>>, %arg5: memref<1x256xf32, #tpu.memory_space<vmem>>, %arg6: memref<256x128xbf16, #tpu.memory_space<vmem>>, %arg7: memref<1x128xf32, #tpu.memory_space<vmem>>, %arg8: memref<128x128xf32, #tpu.memory_space<vmem>>) attributes {dimension_semantics = [#tpu.dimension_semantics<parallel>], iteration_bounds = array<i64: 2>, scalar_prefetch = 0 : i64, scratch_operands = 0 : i64, tpu.core_type = #tpu.core_type<tc>, window_params = [{transform_indices = @transform_0, window_bounds = array<i64: 128, 128>}, {pipeline_mode = #tpu.pipeline_mode<synchronous>, transform_indices = @transform_1, window_bounds = array<i64: 128, 256>}, {pipeline_mode = #tpu.pipeline_mode<synchronous>, transform_indices = @transform_2, window_bounds = array<i64: 1, 256>}, {pipeline_mode = #tpu.pipeline_mode<synchronous>, transform_indices = @transform_3, window_bounds = array<i64: 256, 256>}, {pipeline_mode = #tpu.pipeline_mode<synchronous>, transform_indices = @transform_4, window_bounds = array<i64: 1, 256>}, {pipeline_mode = #tpu.pipeline_mode<synchronous>, transform_indices = @transform_5, window_bounds = array<i64: 256, 128>}, {pipeline_mode = #tpu.pipeline_mode<synchronous>, transform_indices = @transform_6, window_bounds = array<i64: 1, 128>}, {transform_indices = @transform_7, window_bounds = array<i64: 128, 128>}]} {
    %c0 = arith.constant 0 : index
    %c0_0 = arith.constant 0 : index
    %0 = vector.load %arg1[%c0, %c0_0] : memref<128x128xbf16, #tpu.memory_space<vmem>>, vector<128x128xbf16>
    %c0_1 = arith.constant 0 : index
    %c0_2 = arith.constant 0 : index
    %1 = vector.load %arg2[%c0_1, %c0_2] : memref<128x256xbf16, #tpu.memory_space<vmem>>, vector<128x256xbf16>
    %cst = arith.constant dense<0.000000e+00> : vector<128x256xf32>
    %2 = tpu.matmul %0, %1, %cst {dimension_numbers = #tpu.dot_dimension_numbers<[1], [0], [0], [1], [0, 0, 1, 1], [], []>} : vector<128x128xbf16>, vector<128x256xbf16>, vector<128x256xf32> -> vector<128x256xf32>
    %c0_3 = arith.constant 0 : index
    %c0_4 = arith.constant 0 : index
    %3 = vector.load %arg3[%c0_3, %c0_4] : memref<1x256xf32, #tpu.memory_space<vmem>>, vector<1x256xf32>
    %4 = vector.broadcast %3 : vector<1x256xf32> to vector<128x256xf32>
    %5 = arith.addf %2, %4 : vector<128x256xf32>
    %cst_5 = arith.constant 0.000000e+00 : f32
    %6 = vector.broadcast %cst_5 : f32 to vector<128x256xf32>
    %7 = arith.maximumf %5, %6 : vector<128x256xf32>
    %8 = arith.truncf %7 : vector<128x256xf32> to vector<128x256xbf16>
    %c0_6 = arith.constant 0 : index
    %c0_7 = arith.constant 0 : index
    %9 = vector.load %arg4[%c0_6, %c0_7] : memref<256x256xbf16, #tpu.memory_space<vmem>>, vector<256x256xbf16>
    %cst_8 = arith.constant dense<0.000000e+00> : vector<128x256xf32>
    %10 = tpu.matmul %8, %9, %cst_8 {dimension_numbers = #tpu.dot_dimension_numbers<[1], [0], [0], [1], [0, 0, 1, 1], [], []>} : vector<128x256xbf16>, vector<256x256xbf16>, vector<128x256xf32> -> vector<128x256xf32>
    %c0_9 = arith.constant 0 : index
    %c0_10 = arith.constant 0 : index
    %11 = vector.load %arg5[%c0_9, %c0_10] : memref<1x256xf32, #tpu.memory_space<vmem>>, vector<1x256xf32>
    %12 = vector.broadcast %11 : vector<1x256xf32> to vector<128x256xf32>
    %13 = arith.addf %10, %12 : vector<128x256xf32>
    %cst_11 = arith.constant 0.000000e+00 : f32
    %14 = vector.broadcast %cst_11 : f32 to vector<128x256xf32>
    %15 = arith.maximumf %13, %14 : vector<128x256xf32>
    %16 = arith.truncf %15 : vector<128x256xf32> to vector<128x256xbf16>
    %c0_12 = arith.constant 0 : index
    %c0_13 = arith.constant 0 : index
    %17 = vector.load %arg6[%c0_12, %c0_13] : memref<256x128xbf16, #tpu.memory_space<vmem>>, vector<256x128xbf16>
    %cst_14 = arith.constant dense<0.000000e+00> : vector<128x128xf32>
    %18 = tpu.matmul %16, %17, %cst_14 {dimension_numbers = #tpu.dot_dimension_numbers<[1], [0], [0], [1], [0, 0, 1, 1], [], []>} : vector<128x256xbf16>, vector<256x128xbf16>, vector<128x128xf32> -> vector<128x128xf32>
    %c0_15 = arith.constant 0 : index
    %c0_16 = arith.constant 0 : index
    %19 = vector.load %arg7[%c0_15, %c0_16] : memref<1x128xf32, #tpu.memory_space<vmem>>, vector<1x128xf32>
    %20 = vector.broadcast %19 : vector<1x128xf32> to vector<128x128xf32>
    %21 = arith.addf %18, %20 : vector<128x128xf32>
    %c0_17 = arith.constant 0 : index
    %c0_18 = arith.constant 0 : index
    %22 = vector.load %arg8[%c0_17, %c0_18] : memref<128x128xf32, #tpu.memory_space<vmem>>, vector<128x128xf32>
    tpu.vector_store %arg8[%c0_17, %c0_18], %21 {strides = array<i32>} : memref<128x128xf32, #tpu.memory_space<vmem>>, vector<128x128xf32>,
    return
  }
  func.func @transform_0(%arg0: i32) -> (i32, i32) {
    %c0_i32 = arith.constant 0 : i32
    %c0_i32_0 = arith.constant 0 : i32
    return %arg0, %c0_i32 : i32, i32
  }
  func.func @transform_1(%arg0: i32) -> (i32, i32) {
    %c0_i32 = arith.constant 0 : i32
    %c0_i32_0 = arith.constant 0 : i32
    %c0_i32_1 = arith.constant 0 : i32
    return %c0_i32, %c0_i32_0 : i32, i32
  }
  func.func @transform_2(%arg0: i32) -> (i32, i32) {
    %c0_i32 = arith.constant 0 : i32
    %c0_i32_0 = arith.constant 0 : i32
    %c0_i32_1 = arith.constant 0 : i32
    return %c0_i32, %c0_i32_0 : i32, i32
  }
  func.func @transform_3(%arg0: i32) -> (i32, i32) {
    %c0_i32 = arith.constant 0 : i32
    %c0_i32_0 = arith.constant 0 : i32
    %c0_i32_1 = arith.constant 0 : i32
    return %c0_i32, %c0_i32_0 : i32, i32
  }
  func.func @transform_4(%arg0: i32) -> (i32, i32) {
    %c0_i32 = arith.constant 0 : i32
    %c0_i32_0 = arith.constant 0 : i32
    %c0_i32_1 = arith.constant 0 : i32
    return %c0_i32, %c0_i32_0 : i32, i32
  }
  func.func @transform_5(%arg0: i32) -> (i32, i32) {
    %c0_i32 = arith.constant 0 : i32
    %c0_i32_0 = arith.constant 0 : i32
    %c0_i32_1 = arith.constant 0 : i32
    return %c0_i32, %c0_i32_0 : i32, i32
  }
  func.func @transform_6(%arg0: i32) -> (i32, i32) {
    %c0_i32 = arith.constant 0 : i32
    %c0_i32_0 = arith.constant 0 : i32
    %c0_i32_1 = arith.constant 0 : i32
    return %c0_i32, %c0_i32_0 : i32, i32
  }
  func.func @transform_7(%arg0: i32) -> (i32, i32) {
    %c0_i32 = arith.constant 0 : i32
    %c0_i32_0 = arith.constant 0 : i32
    return %arg0, %c0_i32 : i32, i32
  }
}

</mosaic_0001>

<llo_original>
// kernel: tpu_custom_call.1
$region0: #{tpu_custom_call.1}
  #allocation0 [shape = 'u32[]', space=smem, size = 0x4, offset = 0x4, fixed_abs, tag = 'smem constant byte address 0x4 - core index']
  #allocation1 [shape = 'u32[72,128]{1,0:T(1,128)}', space=vmem, size = 0x9000, scoped, tag = 'internal scratch']
  %s0 = inlined_call_operand.hbm [shape: bf16[256,128], index: 0, kind: input, shape index: {}]
  %s1 = inlined_call_operand.hbm [shape: bf16[128,256], index: 1, kind: input, shape index: {}]
  %s2 = inlined_call_operand.hbm [shape: f32[1,256], index: 2, kind: input, shape index: {}]
  %s3 = inlined_call_operand.hbm [shape: bf16[256,256], index: 3, kind: input, shape index: {}]
  %s4 = inlined_call_operand.vmem [shape: f32[1,256], index: 4, kind: input, shape index: {}]
  %s5 = inlined_call_operand.hbm [shape: bf16[256,128], index: 5, kind: input, shape index: {}]
  %s6 = inlined_call_operand.vmem [shape: f32[1,128], index: 6, kind: input, shape index: {}]
  %s7 = inlined_call_operand.hbm [shape: f32[256,128], index: 7, kind: output, shape index: {}]
  %s8 = sld [smem:[#allocation0]]
  $region81: #{tpu_custom_call.1} parent=0
    _
  %s10 = ssub.s32 1, %s8
  %s11 = scalar_select 0, %s10, %s8
  $region1: #{tpu_custom_call.1} parent=0
    #allocation2 [shape = 'u8[65536]{0}', space=vmem, size = 0x10000, scoped, tag = 'input window, operand 0']
    #allocation3 [shape = 's32[2]{0}', space=sflag, size = 0x8, scoped, tag = 'scoped memory for tpu_custom_call.1']
    #allocation4 [shape = 's32[2]{0}', space=sflag, size = 0x8, scoped, tag = 'scoped memory for tpu_custom_call.1']
    #allocation5 [shape = 'u8[65536]{0}', space=vmem, size = 0x10000, scoped, tag = 'input window, operand 1, single buffered']
    #allocation6 [shape = 's32[1]{0}', space=sflag, size = 0x4, scoped, tag = 'scoped memory for tpu_custom_call.1']
    #allocation7 [shape = 'u8[1024]{0}', space=vmem, size = 0x400, scoped, tag = 'input window, operand 2, single buffered']
    #allocation8 [shape = 'u8[131072]{0}', space=vmem, size = 0x20000, scoped, tag = 'input window, operand 3, single buffered']
    #allocation9 [shape = 's32[1]{0}', space=sflag, size = 0x4, scoped, tag = 'scoped memory for tpu_custom_call.1']
    #allocation10 [shape = 'u8[65536]{0}', space=vmem, size = 0x10000, scoped, tag = 'input window, operand 5, single buffered']
    #allocation11 [shape = 'u8[131072]{0}', space=vmem, size = 0x20000, scoped, tag = 'output window, operand 0']
    %12 = vsyncpa [#allocation3], 0
    %s13 = scalar_lea.sflag [#allocation3], 1
    %14 = vsyncpa %s13, 0
    %15 = vsyncpa [#allocation6], 0
    %16 = vsyncpa [#allocation9], 0
    %17 = vsyncpa [#allocation4], 0
    %s18 = scalar_lea.sflag [#allocation4], 1
    %19 = vsyncpa %s18, 0
    loop: start=0, step=1, limit=4
    $region2: #{tpu_custom_call.1} parent=1 // loop_pre_header
      _
    $region3: #{tpu_custom_call.1} parent=1 // loop_header
      %s21 = sphi 0, %s25
      %p22 = scmp.ge.s32.totalorder %s21, 4
      %s31 = sphi 0, %s33
      %s34 = sphi 0, %s31
      %s35 = sphi 0, %s34
      %s51 = sphi 0, %s35
      %s55 = sphi 0, %s55
      %s57 = sphi 0, %s55
      %s58 = sphi 0, %s57
      %s72 = sphi 0, %s58
      %s76 = sphi 0, %s76
      %s78 = sphi 0, %s76
      %s79 = sphi 0, %s78
      %s93 = sphi 0, %s79
      %s97 = sphi 0, %s97
      %s99 = sphi 0, %s97
      %s100 = sphi 0, %s99
      %s114 = sphi 0, %s100
      %s118 = sphi 0, %s118
      %s120 = sphi 0, %s118
      %s121 = sphi 0, %s120
      %s135 = sphi 0, %s121
      %s139 = sphi 0, %s139
      %s141 = sphi 0, %s139
      %s142 = sphi 0, %s141
      %s156 = sphi 0, %s142
      %s160 = sphi 0, %s160
      %s162 = sphi 0, %s160
      %s163 = sphi 0, %s162
      %s177 = sphi 0, %s163
      %s183 = sphi 0, %s185
      %s186 = sphi 0, %s183
      %s187 = sphi 0, %s186
      %s203 = sphi 0, %s187
    $region4: #{tpu_custom_call.1} parent=1 // loop_header_branch
      %24 = sbr.rel (%p22) target = $region8
    $region5: #{tpu_custom_call.1} parent=1 // loop_body
      %s26 = ssub.s32 %s21, 1
      %s27 = ssub.s32 %s21, 2
      %s28 = sadd.s32 %s21, 1
      %s29 = ssub.s32 %s21, %s28
      %p30 = scmp.eq.s32.totalorder %s29, 0
      %s32 = sadd.s32 %s31, 1
      %s33 = scalar_select %p30, %s31, %s32
      %p36 = pneg %p30
      %p37 = scmp.eq.s32.totalorder %s21, 1
      %p38 = por %p36, %p37
      %p39 = scmp.ne.s32.totalorder %s31, %s34
      %p40 = scmp.eq.s32.totalorder %s21, 0
      %p41 = por %p39, %p40
      %p42 = scmp.ne.s32.totalorder %s31, %s34
      %p43 = scmp.eq.s32.totalorder %s26, 1
      %p44 = por %p42, %p43
      %p45 = scmp.ne.s32.totalorder %s34, %s35
      %p46 = scmp.eq.s32.totalorder %s26, 0
      %p47 = por %p45, %p46
      %p48 = scmp.ne.s32.totalorder %s34, %s35
      %p49 = scmp.eq.s32.totalorder %s27, 1
      %p50 = por %p48, %p49
      %p52 = scmp.ne.s32.totalorder %s35, %s51
      %p53 = scmp.eq.s32.totalorder %s27, 0
      %p54 = por %p52, %p53
      %s56 = sadd.s32 %s55, 1
      %p59 = scmp.eq.s32.totalorder %s21, 1
      %p60 = scmp.ne.s32.totalorder %s55, %s57
      %p61 = scmp.eq.s32.totalorder %s21, 0
      %p62 = por %p60, %p61
      %p63 = scmp.ne.s32.totalorder %s55, %s57
      %p64 = scmp.eq.s32.totalorder %s26, 1
      %p65 = por %p63, %p64
      %p66 = scmp.ne.s32.totalorder %s57, %s58
      %p67 = scmp.eq.s32.totalorder %s26, 0
      %p68 = por %p66, %p67
      %p69 = scmp.ne.s32.totalorder %s57, %s58
      %p70 = scmp.eq.s32.totalorder %s27, 1
      %p71 = por %p69, %p70
      %p73 = scmp.ne.s32.totalorder %s58, %s72
      %p74 = scmp.eq.s32.totalorder %s27, 0
      %p75 = por %p73, %p74
      %s77 = sadd.s32 %s76, 1
      %p80 = scmp.eq.s32.totalorder %s21, 1
      %p81 = scmp.ne.s32.totalorder %s76, %s78
      %p82 = scmp.eq.s32.totalorder %s21, 0
      %p83 = por %p81, %p82
      %p84 = scmp.ne.s32.totalorder %s76, %s78
      %p85 = scmp.eq.s32.totalorder %s26, 1
      %p86 = por %p84, %p85
      %p87 = scmp.ne.s32.totalorder %s78, %s79
      %p88 = scmp.eq.s32.totalorder %s26, 0
      %p89 = por %p87, %p88
      %p90 = scmp.ne.s32.totalorder %s78, %s79
      %p91 = scmp.eq.s32.totalorder %s27, 1
      %p92 = por %p90, %p91
      %p94 = scmp.ne.s32.totalorder %s79, %s93
      %p95 = scmp.eq.s32.totalorder %s27, 0
      %p96 = por %p94, %p95
      %s98 = sadd.s32 %s97, 1
      %p101 = scmp.eq.s32.totalorder %s21, 1
      %p102 = scmp.ne.s32.totalorder %s97, %s99
      %p103 = scmp.eq.s32.totalorder %s21, 0
      %p104 = por %p102, %p103
      %p105 = scmp.ne.s32.totalorder %s97, %s99
      %p106 = scmp.eq.s32.totalorder %s26, 1
      %p107 = por %p105, %p106
      %p108 = scmp.ne.s32.totalorder %s99, %s100
      %p109 = scmp.eq.s32.totalorder %s26, 0
      %p110 = por %p108, %p109
      %p111 = scmp.ne.s32.totalorder %s99, %s100
      %p112 = scmp.eq.s32.totalorder %s27, 1
      %p113 = por %p111, %p112
      %p115 = scmp.ne.s32.totalorder %s100, %s114
      %p116 = scmp.eq.s32.totalorder %s27, 0
      %p117 = por %p115, %p116
      %s119 = sadd.s32 %s118, 1
      %p122 = scmp.eq.s32.totalorder %s21, 1
      %p123 = scmp.ne.s32.totalorder %s118, %s120
      %p124 = scmp.eq.s32.totalorder %s21, 0
      %p125 = por %p123, %p124
      %p126 = scmp.ne.s32.totalorder %s118, %s120
      %p127 = scmp.eq.s32.totalorder %s26, 1
      %p128 = por %p126, %p127
      %p129 = scmp.ne.s32.totalorder %s120, %s121
      %p130 = scmp.eq.s32.totalorder %s26, 0
      %p131 = por %p129, %p130
      %p132 = scmp.ne.s32.totalorder %s120, %s121
      %p133 = scmp.eq.s32.totalorder %s27, 1
      %p134 = por %p132, %p133
      %p136 = scmp.ne.s32.totalorder %s121, %s135
      %p137 = scmp.eq.s32.totalorder %s27, 0
      %p138 = por %p136, %p137
      %s140 = sadd.s32 %s139, 1
      %p143 = scmp.eq.s32.totalorder %s21, 1
      %p144 = scmp.ne.s32.totalorder %s139, %s141
      %p145 = scmp.eq.s32.totalorder %s21, 0
      %p146 = por %p144, %p145
      %p147 = scmp.ne.s32.totalorder %s139, %s141
      %p148 = scmp.eq.s32.totalorder %s26, 1
      %p149 = por %p147, %p148
      %p150 = scmp.ne.s32.totalorder %s141, %s142
      %p151 = scmp.eq.s32.totalorder %s26, 0
      %p152 = por %p150, %p151
      %p153 = scmp.ne.s32.totalorder %s141, %s142
      %p154 = scmp.eq.s32.totalorder %s27, 1
      %p155 = por %p153, %p154
      %p157 = scmp.ne.s32.totalorder %s142, %s156
      %p158 = scmp.eq.s32.totalorder %s27, 0
      %p159 = por %p157, %p158
      %s161 = sadd.s32 %s160, 1
      %p164 = scmp.eq.s32.totalorder %s21, 1
      %p165 = scmp.ne.s32.totalorder %s160, %s162
      %p166 = scmp.eq.s32.totalorder %s21, 0
      %p167 = por %p165, %p166
      %p168 = scmp.ne.s32.totalorder %s160, %s162
      %p169 = scmp.eq.s32.totalorder %s26, 1
      %p170 = por %p168, %p169
      %p171 = scmp.ne.s32.totalorder %s162, %s163
      %p172 = scmp.eq.s32.totalorder %s26, 0
      %p173 = por %p171, %p172
      %p174 = scmp.ne.s32.totalorder %s162, %s163
      %p175 = scmp.eq.s32.totalorder %s27, 1
      %p176 = por %p174, %p175
      %p178 = scmp.ne.s32.totalorder %s163, %s177
      %p179 = scmp.eq.s32.totalorder %s27, 0
      %p180 = por %p178, %p179
      %s181 = ssub.s32 %s21, %s28
      %p182 = scmp.eq.s32.totalorder %s181, 0
      %s184 = sadd.s32 %s183, 1
      %s185 = scalar_select %p182, %s183, %s184
      %p188 = pneg %p182
      %p189 = scmp.eq.s32.totalorder %s21, 1
      %p190 = por %p188, %p189
      %p191 = scmp.ne.s32.totalorder %s183, %s186
      %p192 = scmp.eq.s32.totalorder %s21, 0
      %p193 = por %p191, %p192
      %p194 = scmp.ne.s32.totalorder %s183, %s186
      %p195 = scmp.eq.s32.totalorder %s26, 1
      %p196 = por %p194, %p195
      %p197 = scmp.ne.s32.totalorder %s186, %s187
      %p198 = scmp.eq.s32.totalorder %s26, 0
      %p199 = por %p197, %p198
      %p200 = scmp.ne.s32.totalorder %s186, %s187
      %p201 = scmp.eq.s32.totalorder %s27, 1
      %p202 = por %p200, %p201
      %p204 = scmp.ne.s32.totalorder %s187, %s203
      %p205 = scmp.eq.s32.totalorder %s27, 0
      %p206 = por %p204, %p205
      %p207 = scmp.le.s32.totalorder 1, %s21
      %p208 = scmp.lt.s32.totalorder %s21, 3
      %p209 = pnand %p207, %p208
      %p210 = pneg %p209
      // Predicated region
      $region9: #{tpu_custom_call.1} parent=5 // pred_check
        _
      $region10: #{tpu_custom_call.1} parent=5 // pred_check_branch
        %212 = sbr.rel (%p209) target = $region12
      $region11: #{tpu_custom_call.1} parent=5 // pred_region
        %s213 = ssub.s32 %s21, 1
        // Predicated region
        $region13: #{tpu_custom_call.1} parent=11 // pred_check
          %p214 = pneg %p68
        $region14: #{tpu_custom_call.1} parent=11 // pred_check_branch
          %216 = sbr.rel (%p214) target = $region16
        $region15: #{tpu_custom_call.1} parent=11 // pred_region
          %218 = vsyncadd [#allocation6], 0
          %s219 = sshll.u32 %s1, 4
          %s220 = int_to_ptr.hbm [resolvable:$true] %s219
          %s221 = sshll.u32 [#allocation5], 4
          %s222 = int_to_ptr.vmem [resolvable:$true] %s221
          %227 = dma.hbm_to_vmem [thread:$0]  %s220, 2048, %s222, [#allocation6], 128, 128, 8
        $region16: #{tpu_custom_call.1} parent=11 // pred_fallthru
          _
        // Predicated region
        $region17: #{tpu_custom_call.1} parent=11 // pred_check
          %p228 = pneg %p89
        $region18: #{tpu_custom_call.1} parent=11 // pred_check_branch
          %230 = sbr.rel (%p228) target = $region20
        $region19: #{tpu_custom_call.1} parent=11 // pred_region
          %232 = vsyncadd [#allocation6], 0
          %s234 = sshll.u32 %s2, 4
          %s235 = int_to_ptr.hbm [resolvable:$true] %s234
          %s236 = sshll.u32 [#allocation7], 4
          %s237 = int_to_ptr.vmem [resolvable:$true] %s236
          %239 = dma.hbm_to_vmem [thread:$0]  %s235, 32, %s237, [#allocation6]
        $region20: #{tpu_custom_call.1} parent=11 // pred_fallthru
          _
        // Predicated region
        $region21: #{tpu_custom_call.1} parent=11 // pred_check
          %p240 = pneg %p110
        $region22: #{tpu_custom_call.1} parent=11 // pred_check_branch
          %242 = sbr.rel (%p240) target = $region24
        $region23: #{tpu_custom_call.1} parent=11 // pred_region
          %244 = vsyncadd [#allocation9], 0
          %s245 = sshll.u32 %s3, 4
          %s246 = int_to_ptr.hbm [resolvable:$true] %s245
          %s247 = sshll.u32 [#allocation8], 4
          %s248 = int_to_ptr.vmem [resolvable:$true] %s247
          %253 = dma.hbm_to_vmem [thread:$0]  %s246, 4096, %s248, [#allocation9], 128, 128, 8
        $region24: #{tpu_custom_call.1} parent=11 // pred_fallthru
          _
        // Predicated region
        $region25: #{tpu_custom_call.1} parent=11 // pred_check
          %p254 = pneg %p131
        $region26: #{tpu_custom_call.1} parent=11 // pred_check_branch
          %256 = sbr.rel (%p254) target = $region28
        $region27: #{tpu_custom_call.1} parent=11 // pred_region
          _
        $region28: #{tpu_custom_call.1} parent=11 // pred_fallthru
          _
        // Predicated region
        $region29: #{tpu_custom_call.1} parent=11 // pred_check
          %p257 = pneg %p152
        $region30: #{tpu_custom_call.1} parent=11 // pred_check_branch
          %259 = sbr.rel (%p257) target = $region32
        $region31: #{tpu_custom_call.1} parent=11 // pred_region
          %261 = vsyncadd [#allocation9], 0
          %s262 = sshll.u32 %s5, 4
          %s263 = int_to_ptr.hbm [resolvable:$true] %s262
          %s264 = sshll.u32 [#allocation10], 4
          %s265 = int_to_ptr.vmem [resolvable:$true] %s264
          %270 = dma.hbm_to_vmem [thread:$0]  %s263, 2048, %s265, [#allocation9], 64, 64, 4
        $region32: #{tpu_custom_call.1} parent=11 // pred_fallthru
          _
        // Predicated region
        $region33: #{tpu_custom_call.1} parent=11 // pred_check
          %p271 = pneg %p173
        $region34: #{tpu_custom_call.1} parent=11 // pred_check_branch
          %273 = sbr.rel (%p271) target = $region36
        $region35: #{tpu_custom_call.1} parent=11 // pred_region
          _
        $region36: #{tpu_custom_call.1} parent=11 // pred_fallthru
          _
      $region12: #{tpu_custom_call.1} parent=5 // pred_fallthru
        _
      %p274 = scmp.lt.s32.totalorder %s21, 2
      // Predicated region
      $region37: #{tpu_custom_call.1} parent=5 // pred_check
        %p275 = pneg %p274
      $region38: #{tpu_custom_call.1} parent=5 // pred_check_branch
        %277 = sbr.rel (%p275) target = $region40
      $region39: #{tpu_custom_call.1} parent=5 // pred_region
        // Predicated region
        $region41: #{tpu_custom_call.1} parent=39 // pred_check
          %p278 = pneg %p41
        $region42: #{tpu_custom_call.1} parent=39 // pred_check_branch
          %280 = sbr.rel (%p278) target = $region44
        $region43: #{tpu_custom_call.1} parent=39 // pred_region
          %s281 = sand.u32 %s31, 1
          %s282 = scalar_lea.sflag [#allocation3], %s281
          %s283 = sand.u32 %s31, 1
          %s284 = smul.addr %s283, 64
          %s285 = scalar_lea.vmem [#allocation2], %s284
          %s286 = smul.u32 16, %s21
          %288 = vsyncadd %s282, 0
          %s289 = smul.addr %s286, 4
          %s290 = scalar_lea.hbm %s0, %s289
          %s291 = sshll.u32 %s290, 4
          %s292 = int_to_ptr.hbm [resolvable:$true] %s291
          %s293 = sshll.u32 %s285, 4
          %s294 = int_to_ptr.vmem [resolvable:$true] %s293
          %299 = dma.hbm_to_vmem [thread:$0]  %s292, 1024, %s294, %s282, 64, 64, 4
        $region44: #{tpu_custom_call.1} parent=39 // pred_fallthru
          _
      $region40: #{tpu_custom_call.1} parent=5 // pred_fallthru
        _
      %p300 = scmp.le.s32.totalorder 1, %s21
      %p301 = scmp.lt.s32.totalorder %s21, 3
      %p302 = pnand %p300, %p301
      %p303 = pneg %p302
      // Predicated region
      $region45: #{tpu_custom_call.1} parent=5 // pred_check
        _
      $region46: #{tpu_custom_call.1} parent=5 // pred_check_branch
        %305 = sbr.rel (%p302) target = $region48
      $region47: #{tpu_custom_call.1} parent=5 // pred_region
        %s306 = ssub.s32 %s21, 1
        %s307 = sand.u32 %s34, 1
        %s308 = scalar_lea.sflag [#allocation3], %s307
        %s309 = sand.u32 %s34, 1
        %s310 = smul.addr %s309, 64
        %s311 = scalar_lea.vmem [#allocation2], %s310
        // Predicated region
        $region49: #{tpu_custom_call.1} parent=47 // pred_check
          %p312 = pneg %p47
        $region50: #{tpu_custom_call.1} parent=47 // pred_check_branch
          %314 = sbr.rel (%p312) target = $region52
        $region51: #{tpu_custom_call.1} parent=47 // pred_region
          %316 = dma.done %s308, 1024
        $region52: #{tpu_custom_call.1} parent=47 // pred_fallthru
          _
        // Predicated region
        $region53: #{tpu_custom_call.1} parent=47 // pred_check
          %p317 = pneg %p68
        $region54: #{tpu_custom_call.1} parent=47 // pred_check_branch
          %319 = sbr.rel (%p317) target = $region56
        $region55: #{tpu_custom_call.1} parent=47 // pred_region
          %321 = dma.done [#allocation6], 2048
        $region56: #{tpu_custom_call.1} parent=47 // pred_fallthru
          _
        // Predicated region
        $region57: #{tpu_custom_call.1} parent=47 // pred_check
          %p322 = pneg %p89
        $region58: #{tpu_custom_call.1} parent=47 // pred_check_branch
          %324 = sbr.rel (%p322) target = $region60
        $region59: #{tpu_custom_call.1} parent=47 // pred_region
          %326 = dma.done [#allocation6], 32
        $region60: #{tpu_custom_call.1} parent=47 // pred_fallthru
          _
        // Predicated region
        $region61: #{tpu_custom_call.1} parent=47 // pred_check
          %p327 = pneg %p110
        $region62: #{tpu_custom_call.1} parent=47 // pred_check_branch
          %329 = sbr.rel (%p327) target = $region64
        $region63: #{tpu_custom_call.1} parent=47 // pred_region
          %331 = dma.done [#allocation9], 4096
        $region64: #{tpu_custom_call.1} parent=47 // pred_fallthru
          _
        // Predicated region
        $region65: #{tpu_custom_call.1} parent=47 // pred_check
          %p332 = pneg %p152
        $region66: #{tpu_custom_call.1} parent=47 // pred_check_branch
          %334 = sbr.rel (%p332) target = $region68
        $region67: #{tpu_custom_call.1} parent=47 // pred_region
          %336 = dma.done [#allocation9], 2048
        $region68: #{tpu_custom_call.1} parent=47 // pred_fallthru
          _
        %s337 = sand.u32 %s34, 1
        %s338 = scalar_lea.sflag [#allocation3], %s337
        %s339 = sand.u32 %s34, 1
        %s340 = smul.addr %s339, 64
        %s341 = scalar_lea.vmem [#allocation2], %s340
        %p342 = pneg %p47
        %p343 = pneg %p44
        %p344 = pneg %p68
        %p345 = pneg %p65
        %p346 = pneg %p89
        %p347 = pneg %p86
        %p348 = pneg %p110
        %p349 = pneg %p107
        %p350 = pneg %p131
        %p351 = pneg %p128
        %p352 = pneg %p152
        %p353 = pneg %p149
        %p354 = pneg %p173
        %p355 = pneg %p170
        %p356 = pneg %p199
        %p357 = pneg %p196
        %s358 = sand.u32 %s186, 1
        %s359 = scalar_lea.sflag [#allocation4], %s358
        %s360 = sand.u32 %s186, 1
        %s361 = smul.addr %s360, 128
        %s362 = scalar_lea.vmem [#allocation11], %s361
        %s363 = smul.u32 16, %s26
        %s364 = smul.u32 16, %s26
        %v365 = vld [vmem:[%s311] sm:$0xf]
        %v366 = vld [vmem:[%s311 + $0x4] sm:$0xf]
        %v367 = vld [vmem:[%s311 + $0x8] sm:$0xf]
        %v368 = vld [vmem:[%s311 + $0xc] sm:$0xf]
        %v369 = vld [vmem:[%s311 + $0x10] sm:$0xf]
        %v370 = vld [vmem:[%s311 + $0x14] sm:$0xf]
        %v371 = vld [vmem:[%s311 + $0x18] sm:$0xf]
        %v372 = vld [vmem:[%s311 + $0x1c] sm:$0xf]
        %v373 = vld [vmem:[%s311 + $0x20] sm:$0xf]
        %v374 = vld [vmem:[%s311 + $0x24] sm:$0xf]
        %v375 = vld [vmem:[%s311 + $0x28] sm:$0xf]
        %v376 = vld [vmem:[%s311 + $0x2c] sm:$0xf]
        %v377 = vld [vmem:[%s311 + $0x30] sm:$0xf]
        %v378 = vld [vmem:[%s311 + $0x34] sm:$0xf]
        %v379 = vld [vmem:[%s311 + $0x38] sm:$0xf]
        %v380 = vld [vmem:[%s311 + $0x3c] sm:$0xf]
        %v381 = vld [vmem:[#allocation5] sm:$0xff]
        %v382 = vld [vmem:[#allocation5 + $0x8] sm:$0xff]
        %v383 = vld [vmem:[#allocation5 + $0x10] sm:$0xff]
        %v384 = vld [vmem:[#allocation5 + $0x18] sm:$0xff]
        %v385 = vld [vmem:[#allocation5 + $0x20] sm:$0xff]
        %v386 = vld [vmem:[#allocation5 + $0x28] sm:$0xff]
        %v387 = vld [vmem:[#allocation5 + $0x30] sm:$0xff]
        %v388 = vld [vmem:[#allocation5 + $0x38] sm:$0xff]
        %v389 = vld [vmem:[#allocation5 + $0x40] sm:$0xff]
        %v390 = vld [vmem:[#allocation5 + $0x48] sm:$0xff]
        %v391 = vld [vmem:[#allocation5 + $0x50] sm:$0xff]
        %v392 = vld [vmem:[#allocation5 + $0x58] sm:$0xff]
        %v393 = vld [vmem:[#allocation5 + $0x60] sm:$0xff]
        %v394 = vld [vmem:[#allocation5 + $0x68] sm:$0xff]
        %v395 = vld [vmem:[#allocation5 + $0x70] sm:$0xff]
        %v396 = vld [vmem:[#allocation5 + $0x78] sm:$0xff]
        %v397 = vld [vmem:[#allocation7] sm:$0x3]
        %v399 = vperm.slane %v397, 0
        %v400 = vperm.slane %v397, 1
        %v419 = vunpack.c.l.b16 %v365
        %v420 = vunpack.c.l.b16 %v366
        %v421 = vunpack.c.l.b16 %v367
        %v422 = vunpack.c.l.b16 %v368
        %v423 = vunpack.c.l.b16 %v369
        %v424 = vunpack.c.l.b16 %v370
        %v425 = vunpack.c.l.b16 %v371
        %v426 = vunpack.c.l.b16 %v372
        %v427 = vunpack.c.l.b16 %v373
        %v428 = vunpack.c.l.b16 %v374
        %v429 = vunpack.c.l.b16 %v375
        %v430 = vunpack.c.l.b16 %v376
        %v431 = vunpack.c.l.b16 %v377
        %v432 = vunpack.c.l.b16 %v378
        %v433 = vunpack.c.l.b16 %v379
        %v434 = vunpack.c.l.b16 %v380
        %v435 = vpack.c.b16 %v420, %v419
        %v436 = vpack.c.b16 %v422, %v421
        %v437 = vpack.c.b16 %v424, %v423
        %v438 = vpack.c.b16 %v426, %v425
        %v439 = vpack.c.b16 %v428, %v427
        %v440 = vpack.c.b16 %v430, %v429
        %v441 = vpack.c.b16 %v432, %v431
        %v442 = vpack.c.b16 %v434, %v433
        %v467 = vunpack.c.l.b16 %v381
        %v468 = vunpack.c.h.b16 %v381
        %v469 = vunpack.c.l.b16 %v382
        %v470 = vunpack.c.h.b16 %v382
        %v471 = vunpack.c.l.b16 %v383
        %v472 = vunpack.c.h.b16 %v383
        %v473 = vunpack.c.l.b16 %v384
        %v474 = vunpack.c.h.b16 %v384
        %v475 = vunpack.c.l.b16 %v385
        %v476 = vunpack.c.h.b16 %v385
        %v477 = vunpack.c.l.b16 %v386
        %v478 = vunpack.c.h.b16 %v386
        %v479 = vunpack.c.l.b16 %v387
        %v480 = vunpack.c.h.b16 %v387
        %v481 = vunpack.c.l.b16 %v388
        %v482 = vunpack.c.h.b16 %v388
        %v483 = vunpack.c.l.b16 %v389
        %v484 = vunpack.c.h.b16 %v389
        %v485 = vunpack.c.l.b16 %v390
        %v486 = vunpack.c.h.b16 %v390
        %v487 = vunpack.c.l.b16 %v391
        %v488 = vunpack.c.h.b16 %v391
        %v489 = vunpack.c.l.b16 %v392
        %v490 = vunpack.c.h.b16 %v392
        %v491 = vunpack.c.l.b16 %v393
        %v492 = vunpack.c.h.b16 %v393
        %v493 = vunpack.c.l.b16 %v394
        %v494 = vunpack.c.h.b16 %v394
        %v495 = vunpack.c.l.b16 %v395
        %v496 = vunpack.c.h.b16 %v395
        %v497 = vunpack.c.l.b16 %v396
        %v498 = vunpack.c.h.b16 %v396
        %v499 = vpack.c.b16 %v469, %v467
        %v500 = vpack.c.b16 %v470, %v468
        %v501 = vpack.c.b16 %v473, %v471
        %v502 = vpack.c.b16 %v474, %v472
        %v503 = vpack.c.b16 %v477, %v475
        %v504 = vpack.c.b16 %v478, %v476
        %v505 = vpack.c.b16 %v481, %v479
        %v506 = vpack.c.b16 %v482, %v480
        %v507 = vpack.c.b16 %v485, %v483
        %v508 = vpack.c.b16 %v486, %v484
        %v509 = vpack.c.b16 %v489, %v487
        %v510 = vpack.c.b16 %v490, %v488
        %v511 = vpack.c.b16 %v493, %v491
        %v512 = vpack.c.b16 %v494, %v492
        %v513 = vpack.c.b16 %v497, %v495
        %v514 = vpack.c.b16 %v498, %v496
        %531 = vmatpush.bf16.msra.mxu0 %v513
        %532 = vmatpush.bf16.msra.mxu0 %v511
        %533 = vmatpush.bf16.msra.mxu0 %v509
        %534 = vmatpush.bf16.msra.mxu0 %v507
        %535 = vmatpush.bf16.msra.mxu0 %v505
        %536 = vmatpush.bf16.msra.mxu0 %v503
        %537 = vmatpush.bf16.msra.mxu0 %v501
        %538 = vmatpush.bf16.msra.mxu0 %v499
        %539 = vmatmul.bf16.gmra.mxu0 %v435
        %v540 = vpop.f32.mrf.mxu0
        %v541 = vadd.f32 %v399, %v540
        %v542 = vpop.f32.mrf.mxu0
        %v543 = vadd.f32 %v399, %v542
        %544 = vmatmul.bf16.gmra.mxu0 %v436
        %v545 = vpop.f32.mrf.mxu0
        %v546 = vadd.f32 %v399, %v545
        %v547 = vpop.f32.mrf.mxu0
        %v548 = vadd.f32 %v399, %v547
        %549 = vmatmul.bf16.gmra.mxu0 %v437
        %v550 = vpop.f32.mrf.mxu0
        %v551 = vadd.f32 %v399, %v550
        %v552 = vpop.f32.mrf.mxu0
        %v553 = vadd.f32 %v399, %v552
        %554 = vmatmul.bf16.gmra.mxu0 %v438
        %v555 = vpop.f32.mrf.mxu0
        %v556 = vadd.f32 %v399, %v555
        %v557 = vpop.f32.mrf.mxu0
        %v558 = vadd.f32 %v399, %v557
        %559 = vmatmul.bf16.gmra.mxu0 %v439
        %v560 = vpop.f32.mrf.mxu0
        %v561 = vadd.f32 %v399, %v560
        %v562 = vpop.f32.mrf.mxu0
        %v563 = vadd.f32 %v399, %v562
        %564 = vmatmul.bf16.gmra.mxu0 %v440
        %v565 = vpop.f32.mrf.mxu0
        %v566 = vadd.f32 %v399, %v565
        %v567 = vpop.f32.mrf.mxu0
        %v568 = vadd.f32 %v399, %v567
        %569 = vmatmul.bf16.gmra.mxu0 %v441
        %v570 = vpop.f32.mrf.mxu0
        %v571 = vadd.f32 %v399, %v570
        %v572 = vpop.f32.mrf.mxu0
        %v573 = vadd.f32 %v399, %v572
        %574 = vmatmul.bf16.gmra.mxu0 %v442
        %v575 = vpop.f32.mrf.mxu0
        %v576 = vadd.f32 %v399, %v575
        %v577 = vpop.f32.mrf.mxu0
        %v578 = vadd.f32 %v399, %v577
        %579 = vdwg.mxu0
        %580 = vmatpush.bf16.msra.mxu0 %v514
        %581 = vmatpush.bf16.msra.mxu0 %v512
        %582 = vmatpush.bf16.msra.mxu0 %v510
        %583 = vmatpush.bf16.msra.mxu0 %v508
        %584 = vmatpush.bf16.msra.mxu0 %v506
        %585 = vmatpush.bf16.msra.mxu0 %v504
        %586 = vmatpush.bf16.msra.mxu0 %v502
        %587 = vmatpush.bf16.msra.mxu0 %v500
        %588 = vmatmul.bf16.gmra.mxu0 %v435
        %v589 = vpop.f32.mrf.mxu0
        %v590 = vadd.f32 %v400, %v589
        %v591 = vpop.f32.mrf.mxu0
        %v592 = vadd.f32 %v400, %v591
        %593 = vmatmul.bf16.gmra.mxu0 %v436
        %v594 = vpop.f32.mrf.mxu0
        %v595 = vadd.f32 %v400, %v594
        %v596 = vpop.f32.mrf.mxu0
        %v597 = vadd.f32 %v400, %v596
        %598 = vmatmul.bf16.gmra.mxu0 %v437
        %v599 = vpop.f32.mrf.mxu0
        %v600 = vadd.f32 %v400, %v599
        %v601 = vpop.f32.mrf.mxu0
        %v602 = vadd.f32 %v400, %v601
        %603 = vmatmul.bf16.gmra.mxu0 %v438
        %v604 = vpop.f32.mrf.mxu0
        %v605 = vadd.f32 %v400, %v604
        %v606 = vpop.f32.mrf.mxu0
        %v607 = vadd.f32 %v400, %v606
        %608 = vmatmul.bf16.gmra.mxu0 %v439
        %v609 = vpop.f32.mrf.mxu0
        %v610 = vadd.f32 %v400, %v609
        %v611 = vpop.f32.mrf.mxu0
        %v612 = vadd.f32 %v400, %v611
        %613 = vmatmul.bf16.gmra.mxu0 %v440
        %v614 = vpop.f32.mrf.mxu0
        %v615 = vadd.f32 %v400, %v614
        %v616 = vpop.f32.mrf.mxu0
        %v617 = vadd.f32 %v400, %v616
        %618 = vmatmul.bf16.gmra.mxu0 %v441
        %v619 = vpop.f32.mrf.mxu0
        %v620 = vadd.f32 %v400, %v619
        %v621 = vpop.f32.mrf.mxu0
        %v622 = vadd.f32 %v400, %v621
        %623 = vmatmul.bf16.gmra.mxu0 %v442
        %v624 = vpop.f32.mrf.mxu0
        %v625 = vadd.f32 %v400, %v624
        %v626 = vpop.f32.mrf.mxu0
        %v627 = vadd.f32 %v400, %v626
        %628 = vdwg.mxu0
        %v629 = vmax.f32 %v541, 0.0
        %v630 = vmax.f32 %v590, 0.0
        %v631 = vmax.f32 %v543, 0.0
        %v632 = vmax.f32 %v592, 0.0
        %v633 = vmax.f32 %v546, 0.0
        %v634 = vmax.f32 %v595, 0.0
        %v635 = vmax.f32 %v548, 0.0
        %v636 = vmax.f32 %v597, 0.0
        %v637 = vmax.f32 %v551, 0.0
        %v638 = vmax.f32 %v600, 0.0
        %v639 = vmax.f32 %v553, 0.0
        %v640 = vmax.f32 %v602, 0.0
        %v641 = vmax.f32 %v556, 0.0
        %v642 = vmax.f32 %v605, 0.0
        %v643 = vmax.f32 %v558, 0.0
        %v644 = vmax.f32 %v607, 0.0
        %v645 = vmax.f32 %v561, 0.0
        %v646 = vmax.f32 %v610, 0.0
        %v647 = vmax.f32 %v563, 0.0
        %v648 = vmax.f32 %v612, 0.0
        %v649 = vmax.f32 %v566, 0.0
        %v650 = vmax.f32 %v615, 0.0
        %v651 = vmax.f32 %v568, 0.0
        %v652 = vmax.f32 %v617, 0.0
        %v653 = vmax.f32 %v571, 0.0
        %v654 = vmax.f32 %v620, 0.0
        %v655 = vmax.f32 %v573, 0.0
        %v656 = vmax.f32 %v622, 0.0
        %v657 = vmax.f32 %v576, 0.0
        %v658 = vmax.f32 %v625, 0.0
        %v659 = vmax.f32 %v578, 0.0
        %v660 = vmax.f32 %v627, 0.0
        %v661 = vpack.c.bf16 %v631, %v629
        %v662 = vpack.c.bf16 %v632, %v630
        %v663 = vpack.c.bf16 %v635, %v633
        %v664 = vpack.c.bf16 %v636, %v634
        %v665 = vpack.c.bf16 %v639, %v637
        %v666 = vpack.c.bf16 %v640, %v638
        %v667 = vpack.c.bf16 %v643, %v641
        %v668 = vpack.c.bf16 %v644, %v642
        %v669 = vpack.c.bf16 %v647, %v645
        %v670 = vpack.c.bf16 %v648, %v646
        %v671 = vpack.c.bf16 %v651, %v649
        %v672 = vpack.c.bf16 %v652, %v650
        %v673 = vpack.c.bf16 %v655, %v653
        %v674 = vpack.c.bf16 %v656, %v654
        %v675 = vpack.c.bf16 %v659, %v657
        %v676 = vpack.c.bf16 %v660, %v658
        %v677 = vld [vmem:[#allocation8] sm:$0xff]
        %v678 = vld [vmem:[#allocation8 + $0x8] sm:$0xff]
        %v679 = vld [vmem:[#allocation8 + $0x10] sm:$0xff]
        %v680 = vld [vmem:[#allocation8 + $0x18] sm:$0xff]
        %v681 = vld [vmem:[#allocation8 + $0x20] sm:$0xff]
        %v682 = vld [vmem:[#allocation8 + $0x28] sm:$0xff]
        %v683 = vld [vmem:[#allocation8 + $0x30] sm:$0xff]
        %v684 = vld [vmem:[#allocation8 + $0x38] sm:$0xff]
        %v685 = vld [vmem:[#allocation8 + $0x40] sm:$0xff]
        %v686 = vld [vmem:[#allocation8 + $0x48] sm:$0xff]
        %v687 = vld [vmem:[#allocation8 + $0x50] sm:$0xff]
        %v688 = vld [vmem:[#allocation8 + $0x58] sm:$0xff]
        %v689 = vld [vmem:[#allocation8 + $0x60] sm:$0xff]
        %v690 = vld [vmem:[#allocation8 + $0x68] sm:$0xff]
        %v691 = vld [vmem:[#allocation8 + $0x70] sm:$0xff]
        %v692 = vld [vmem:[#allocation8 + $0x78] sm:$0xff]
        %v693 = vld [vmem:[#allocation8 + $0x80] sm:$0xff]
        %v694 = vld [vmem:[#allocation8 + $0x88] sm:$0xff]
        %v695 = vld [vmem:[#allocation8 + $0x90] sm:$0xff]
        %v696 = vld [vmem:[#allocation8 + $0x98] sm:$0xff]
        %v697 = vld [vmem:[#allocation8 + $0xa0] sm:$0xff]
        %v698 = vld [vmem:[#allocation8 + $0xa8] sm:$0xff]
        %v699 = vld [vmem:[#allocation8 + $0xb0] sm:$0xff]
        %v700 = vld [vmem:[#allocation8 + $0xb8] sm:$0xff]
        %v701 = vld [vmem:[#allocation8 + $0xc0] sm:$0xff]
        %v702 = vld [vmem:[#allocation8 + $0xc8] sm:$0xff]
        %v703 = vld [vmem:[#allocation8 + $0xd0] sm:$0xff]
        %v704 = vld [vmem:[#allocation8 + $0xd8] sm:$0xff]
        %v705 = vld [vmem:[#allocation8 + $0xe0] sm:$0xff]
        %v706 = vld [vmem:[#allocation8 + $0xe8] sm:$0xff]
        %v707 = vld [vmem:[#allocation8 + $0xf0] sm:$0xff]
        %v708 = vld [vmem:[#allocation8 + $0xf8] sm:$0xff]
        %v709 = vld [vmem:[%s4] sm:$0x3]
        %v711 = vperm.slane %v709, 0
        %v712 = vperm.slane %v709, 1
        %v747 = vunpack.c.l.b16 %v677
        %v748 = vunpack.c.h.b16 %v677
        %v749 = vunpack.c.l.b16 %v678
        %v750 = vunpack.c.h.b16 %v678
        %v751 = vunpack.c.l.b16 %v679
        %v752 = vunpack.c.h.b16 %v679
        %v753 = vunpack.c.l.b16 %v680
        %v754 = vunpack.c.h.b16 %v680
        %v755 = vunpack.c.l.b16 %v681
        %v756 = vunpack.c.h.b16 %v681
        %v757 = vunpack.c.l.b16 %v682
        %v758 = vunpack.c.h.b16 %v682
        %v759 = vunpack.c.l.b16 %v683
        %v760 = vunpack.c.h.b16 %v683
        %v761 = vunpack.c.l.b16 %v684
        %v762 = vunpack.c.h.b16 %v684
        %v763 = vunpack.c.l.b16 %v685
        %v764 = vunpack.c.h.b16 %v685
        %v765 = vunpack.c.l.b16 %v686
        %v766 = vunpack.c.h.b16 %v686
        %v767 = vunpack.c.l.b16 %v687
        %v768 = vunpack.c.h.b16 %v687
        %v769 = vunpack.c.l.b16 %v688
        %v770 = vunpack.c.h.b16 %v688
        %v771 = vunpack.c.l.b16 %v689
        %v772 = vunpack.c.h.b16 %v689
        %v773 = vunpack.c.l.b16 %v690
        %v774 = vunpack.c.h.b16 %v690
        %v775 = vunpack.c.l.b16 %v691
        %v776 = vunpack.c.h.b16 %v691
        %v777 = vunpack.c.l.b16 %v692
        %v778 = vunpack.c.h.b16 %v692
        %v779 = vunpack.c.l.b16 %v693
        %v780 = vunpack.c.h.b16 %v693
        %v781 = vunpack.c.l.b16 %v694
        %v782 = vunpack.c.h.b16 %v694
        %v783 = vunpack.c.l.b16 %v695
        %v784 = vunpack.c.h.b16 %v695
        %v785 = vunpack.c.l.b16 %v696
        %v786 = vunpack.c.h.b16 %v696
        %v787 = vunpack.c.l.b16 %v697
        %v788 = vunpack.c.h.b16 %v697
        %v789 = vunpack.c.l.b16 %v698
        %v790 = vunpack.c.h.b16 %v698
        %v791 = vunpack.c.l.b16 %v699
        %v792 = vunpack.c.h.b16 %v699
        %v793 = vunpack.c.l.b16 %v700
        %v794 = vunpack.c.h.b16 %v700
        %v795 = vunpack.c.l.b16 %v701
        %v796 = vunpack.c.h.b16 %v701
        %v797 = vunpack.c.l.b16 %v702
        %v798 = vunpack.c.h.b16 %v702
        %v799 = vunpack.c.l.b16 %v703
        %v800 = vunpack.c.h.b16 %v703
        %v801 = vunpack.c.l.b16 %v704
        %v802 = vunpack.c.h.b16 %v704
        %v803 = vunpack.c.l.b16 %v705
        %v804 = vunpack.c.h.b16 %v705
        %v805 = vunpack.c.l.b16 %v706
        %v806 = vunpack.c.h.b16 %v706
        %v807 = vunpack.c.l.b16 %v707
        %v808 = vunpack.c.h.b16 %v707
        %v809 = vunpack.c.l.b16 %v708
        %v810 = vunpack.c.h.b16 %v708
        %v811 = vpack.c.b16 %v749, %v747
        %v812 = vpack.c.b16 %v750, %v748
        %v813 = vpack.c.b16 %v753, %v751
        %v814 = vpack.c.b16 %v754, %v752
        %v815 = vpack.c.b16 %v757, %v755
        %v816 = vpack.c.b16 %v758, %v756
        %v817 = vpack.c.b16 %v761, %v759
        %v818 = vpack.c.b16 %v762, %v760
        %v819 = vpack.c.b16 %v765, %v763
        %v820 = vpack.c.b16 %v766, %v764
        %v821 = vpack.c.b16 %v769, %v767
        %v822 = vpack.c.b16 %v770, %v768
        %v823 = vpack.c.b16 %v773, %v771
        %v824 = vpack.c.b16 %v774, %v772
        %v825 = vpack.c.b16 %v777, %v775
        %v826 = vpack.c.b16 %v778, %v776
        %v827 = vpack.c.b16 %v781, %v779
        %v828 = vpack.c.b16 %v782, %v780
        %v829 = vpack.c.b16 %v785, %v783
        %v830 = vpack.c.b16 %v786, %v784
        %v831 = vpack.c.b16 %v789, %v787
        %v832 = vpack.c.b16 %v790, %v788
        %v833 = vpack.c.b16 %v793, %v791
        %v834 = vpack.c.b16 %v794, %v792
        %v835 = vpack.c.b16 %v797, %v795
        %v836 = vpack.c.b16 %v798, %v796
        %v837 = vpack.c.b16 %v801, %v799
        %v838 = vpack.c.b16 %v802, %v800
        %v839 = vpack.c.b16 %v805, %v803
        %v840 = vpack.c.b16 %v806, %v804
        %v841 = vpack.c.b16 %v809, %v807
        %v842 = vpack.c.b16 %v810, %v808
        %875 = vmatpush.bf16.msra.mxu0 %v825
        %876 = vmatpush.bf16.msra.mxu0 %v823
        %877 = vmatpush.bf16.msra.mxu0 %v821
        %878 = vmatpush.bf16.msra.mxu0 %v819
        %879 = vmatpush.bf16.msra.mxu0 %v817
        %880 = vmatpush.bf16.msra.mxu0 %v815
        %881 = vmatpush.bf16.msra.mxu0 %v813
        %882 = vmatpush.bf16.msra.mxu0 %v811
        %883 = vmatmul.bf16.gmra.mxu0 %v661
        %v884 = vpop.f32.mrf.mxu0
        %v885 = vadd.f32 %v711, %v884
        %v886 = vpop.f32.mrf.mxu0
        %v887 = vadd.f32 %v711, %v886
        %888 = vmatmul.bf16.gmra.mxu0 %v663
        %v889 = vpop.f32.mrf.mxu0
        %v890 = vadd.f32 %v711, %v889
        %v891 = vpop.f32.mrf.mxu0
        %v892 = vadd.f32 %v711, %v891
        %893 = vmatmul.bf16.gmra.mxu0 %v665
        %v894 = vpop.f32.mrf.mxu0
        %v895 = vadd.f32 %v711, %v894
        %v896 = vpop.f32.mrf.mxu0
        %v897 = vadd.f32 %v711, %v896
        %898 = vmatmul.bf16.gmra.mxu0 %v667
        %v899 = vpop.f32.mrf.mxu0
        %v900 = vadd.f32 %v711, %v899
        %v901 = vpop.f32.mrf.mxu0
        %v902 = vadd.f32 %v711, %v901
        %903 = vmatmul.bf16.gmra.mxu0 %v669
        %v904 = vpop.f32.mrf.mxu0
        %v905 = vadd.f32 %v711, %v904
        %v906 = vpop.f32.mrf.mxu0
        %v907 = vadd.f32 %v711, %v906
        %908 = vmatmul.bf16.gmra.mxu0 %v671
        %v909 = vpop.f32.mrf.mxu0
        %v910 = vadd.f32 %v711, %v909
        %v911 = vpop.f32.mrf.mxu0
        %v912 = vadd.f32 %v711, %v911
        %913 = vmatmul.bf16.gmra.mxu0 %v673
        %v914 = vpop.f32.mrf.mxu0
        %v915 = vadd.f32 %v711, %v914
        %v916 = vpop.f32.mrf.mxu0
        %v917 = vadd.f32 %v711, %v916
        %918 = vmatmul.bf16.gmra.mxu0 %v675
        %v919 = vpop.f32.mrf.mxu0
        %v920 = vadd.f32 %v711, %v919
        %v921 = vpop.f32.mrf.mxu0
        %v922 = vadd.f32 %v711, %v921
        %923 = vdwg.mxu0
        %924 = vmatpush.bf16.msra.mxu0 %v841
        %925 = vmatpush.bf16.msra.mxu0 %v839
        %926 = vmatpush.bf16.msra.mxu0 %v837
        %927 = vmatpush.bf16.msra.mxu0 %v835
        %928 = vmatpush.bf16.msra.mxu0 %v833
        %929 = vmatpush.bf16.msra.mxu0 %v831
        %930 = vmatpush.bf16.msra.mxu0 %v829
        %931 = vmatpush.bf16.msra.mxu0 %v827
        %932 = vmatmul.bf16.gmra.mxu0 %v662
        %v933 = vpop.f32.mrf.mxu0
        %v934 = vadd.f32 %v885, %v933
        %v935 = vpop.f32.mrf.mxu0
        %v936 = vadd.f32 %v887, %v935
        %937 = vmatmul.bf16.gmra.mxu0 %v664
        %v938 = vpop.f32.mrf.mxu0
        %v939 = vadd.f32 %v890, %v938
        %v940 = vpop.f32.mrf.mxu0
        %v941 = vadd.f32 %v892, %v940
        %942 = vmatmul.bf16.gmra.mxu0 %v666
        %v943 = vpop.f32.mrf.mxu0
        %v944 = vadd.f32 %v895, %v943
        %v945 = vpop.f32.mrf.mxu0
        %v946 = vadd.f32 %v897, %v945
        %947 = vmatmul.bf16.gmra.mxu0 %v668
        %v948 = vpop.f32.mrf.mxu0
        %v949 = vadd.f32 %v900, %v948
        %v950 = vpop.f32.mrf.mxu0
        %v951 = vadd.f32 %v902, %v950
        %952 = vmatmul.bf16.gmra.mxu0 %v670
        %v953 = vpop.f32.mrf.mxu0
        %v954 = vadd.f32 %v905, %v953
        %v955 = vpop.f32.mrf.mxu0
        %v956 = vadd.f32 %v907, %v955
        %957 = vmatmul.bf16.gmra.mxu0 %v672
        %v958 = vpop.f32.mrf.mxu0
        %v959 = vadd.f32 %v910, %v958
        %v960 = vpop.f32.mrf.mxu0
        %v961 = vadd.f32 %v912, %v960
        %962 = vmatmul.bf16.gmra.mxu0 %v674
        %v963 = vpop.f32.mrf.mxu0
        %v964 = vadd.f32 %v915, %v963
        %v965 = vpop.f32.mrf.mxu0
        %v966 = vadd.f32 %v917, %v965
        %967 = vmatmul.bf16.gmra.mxu0 %v676
        %v968 = vpop.f32.mrf.mxu0
        %v969 = vadd.f32 %v920, %v968
        %v970 = vpop.f32.mrf.mxu0
        %v971 = vadd.f32 %v922, %v970
        %972 = vdwg.mxu0
        %973 = vmatpush.bf16.msra.mxu0 %v826
        %974 = vmatpush.bf16.msra.mxu0 %v824
        %975 = vmatpush.bf16.msra.mxu0 %v822
        %976 = vmatpush.bf16.msra.mxu0 %v820
        %977 = vmatpush.bf16.msra.mxu0 %v818
        %978 = vmatpush.bf16.msra.mxu0 %v816
        %979 = vmatpush.bf16.msra.mxu0 %v814
        %980 = vmatpush.bf16.msra.mxu0 %v812
        %981 = vmatmul.bf16.gmra.mxu0 %v661
        %v982 = vpop.f32.mrf.mxu0
        %v983 = vadd.f32 %v712, %v982
        %v984 = vpop.f32.mrf.mxu0
        %v985 = vadd.f32 %v712, %v984
        %986 = vmatmul.bf16.gmra.mxu0 %v663
        %v987 = vpop.f32.mrf.mxu0
        %v988 = vadd.f32 %v712, %v987
        %v989 = vpop.f32.mrf.mxu0
        %v990 = vadd.f32 %v712, %v989
        %991 = vmatmul.bf16.gmra.mxu0 %v665
        %v992 = vpop.f32.mrf.mxu0
        %v993 = vadd.f32 %v712, %v992
        %v994 = vpop.f32.mrf.mxu0
        %v995 = vadd.f32 %v712, %v994
        %996 = vmatmul.bf16.gmra.mxu0 %v667
        %v997 = vpop.f32.mrf.mxu0
        %v998 = vadd.f32 %v712, %v997
        %v999 = vpop.f32.mrf.mxu0
        %v1000 = vadd.f32 %v712, %v999
        %1001 = vmatmul.bf16.gmra.mxu0 %v669
        %v1002 = vpop.f32.mrf.mxu0
        %v1003 = vadd.f32 %v712, %v1002
        %v1004 = vpop.f32.mrf.mxu0
        %v1005 = vadd.f32 %v712, %v1004
        %1006 = vmatmul.bf16.gmra.mxu0 %v671
        %v1007 = vpop.f32.mrf.mxu0
        %v1008 = vadd.f32 %v712, %v1007
        %v1009 = vpop.f32.mrf.mxu0
        %v1010 = vadd.f32 %v712, %v1009
        %1011 = vmatmul.bf16.gmra.mxu0 %v673
        %v1012 = vpop.f32.mrf.mxu0
        %v1013 = vadd.f32 %v712, %v1012
        %v1014 = vpop.f32.mrf.mxu0
        %v1015 = vadd.f32 %v712, %v1014
        %1016 = vmatmul.bf16.gmra.mxu0 %v675
        %v1017 = vpop.f32.mrf.mxu0
        %v1018 = vadd.f32 %v712, %v1017
        %v1019 = vpop.f32.mrf.mxu0
        %v1020 = vadd.f32 %v712, %v1019
        %1021 = vdwg.mxu0
        %1022 = vmatpush.bf16.msra.mxu0 %v842
        %1023 = vmatpush.bf16.msra.mxu0 %v840
        %1024 = vmatpush.bf16.msra.mxu0 %v838
        %1025 = vmatpush.bf16.msra.mxu0 %v836
        %1026 = vmatpush.bf16.msra.mxu0 %v834
        %1027 = vmatpush.bf16.msra.mxu0 %v832
        %1028 = vmatpush.bf16.msra.mxu0 %v830
        %1029 = vmatpush.bf16.msra.mxu0 %v828
        %1030 = vmatmul.bf16.gmra.mxu0 %v662
        %v1031 = vpop.f32.mrf.mxu0
        %v1032 = vadd.f32 %v983, %v1031
        %v1033 = vpop.f32.mrf.mxu0
        %v1034 = vadd.f32 %v985, %v1033
        %1035 = vmatmul.bf16.gmra.mxu0 %v664
        %v1036 = vpop.f32.mrf.mxu0
        %v1037 = vadd.f32 %v988, %v1036
        %v1038 = vpop.f32.mrf.mxu0
        %v1039 = vadd.f32 %v990, %v1038
        %1040 = vmatmul.bf16.gmra.mxu0 %v666
        %v1041 = vpop.f32.mrf.mxu0
        %v1042 = vadd.f32 %v993, %v1041
        %v1043 = vpop.f32.mrf.mxu0
        %v1044 = vadd.f32 %v995, %v1043
        %1045 = vmatmul.bf16.gmra.mxu0 %v668
        %v1046 = vpop.f32.mrf.mxu0
        %v1047 = vadd.f32 %v998, %v1046
        %v1048 = vpop.f32.mrf.mxu0
        %v1049 = vadd.f32 %v1000, %v1048
        %1050 = vmatmul.bf16.gmra.mxu0 %v670
        %v1051 = vpop.f32.mrf.mxu0
        %v1052 = vadd.f32 %v1003, %v1051
        %v1053 = vpop.f32.mrf.mxu0
        %v1054 = vadd.f32 %v1005, %v1053
        %1055 = vmatmul.bf16.gmra.mxu0 %v672
        %v1056 = vpop.f32.mrf.mxu0
        %v1057 = vadd.f32 %v1008, %v1056
        %v1058 = vpop.f32.mrf.mxu0
        %v1059 = vadd.f32 %v1010, %v1058
        %1060 = vmatmul.bf16.gmra.mxu0 %v674
        %v1061 = vpop.f32.mrf.mxu0
        %v1062 = vadd.f32 %v1013, %v1061
        %v1063 = vpop.f32.mrf.mxu0
        %v1064 = vadd.f32 %v1015, %v1063
        %1065 = vmatmul.bf16.gmra.mxu0 %v676
        %v1066 = vpop.f32.mrf.mxu0
        %v1067 = vadd.f32 %v1018, %v1066
        %v1068 = vpop.f32.mrf.mxu0
        %v1069 = vadd.f32 %v1020, %v1068
        %1070 = vdwg.mxu0
        %v1071 = vmax.f32 %v934, 0.0
        %v1072 = vmax.f32 %v1032, 0.0
        %v1073 = vmax.f32 %v936, 0.0
        %v1074 = vmax.f32 %v1034, 0.0
        %v1075 = vmax.f32 %v939, 0.0
        %v1076 = vmax.f32 %v1037, 0.0
        %v1077 = vmax.f32 %v941, 0.0
        %v1078 = vmax.f32 %v1039, 0.0
        %v1079 = vmax.f32 %v944, 0.0
        %v1080 = vmax.f32 %v1042, 0.0
        %v1081 = vmax.f32 %v946, 0.0
        %v1082 = vmax.f32 %v1044, 0.0
        %v1083 = vmax.f32 %v949, 0.0
        %v1084 = vmax.f32 %v1047, 0.0
        %v1085 = vmax.f32 %v951, 0.0
        %v1086 = vmax.f32 %v1049, 0.0
        %v1087 = vmax.f32 %v954, 0.0
        %v1088 = vmax.f32 %v1052, 0.0
        %v1089 = vmax.f32 %v956, 0.0
        %v1090 = vmax.f32 %v1054, 0.0
        %v1091 = vmax.f32 %v959, 0.0
        %v1092 = vmax.f32 %v1057, 0.0
        %v1093 = vmax.f32 %v961, 0.0
        %v1094 = vmax.f32 %v1059, 0.0
        %v1095 = vmax.f32 %v964, 0.0
        %v1096 = vmax.f32 %v1062, 0.0
        %v1097 = vmax.f32 %v966, 0.0
        %v1098 = vmax.f32 %v1064, 0.0
        %v1099 = vmax.f32 %v969, 0.0
        %v1100 = vmax.f32 %v1067, 0.0
        %v1101 = vmax.f32 %v971, 0.0
        %v1102 = vmax.f32 %v1069, 0.0
        %v1103 = vpack.c.bf16 %v1073, %v1071
        %v1104 = vpack.c.bf16 %v1074, %v1072
        %v1105 = vpack.c.bf16 %v1077, %v1075
        %v1106 = vpack.c.bf16 %v1078, %v1076
        %v1107 = vpack.c.bf16 %v1081, %v1079
        %v1108 = vpack.c.bf16 %v1082, %v1080
        %v1109 = vpack.c.bf16 %v1085, %v1083
        %v1110 = vpack.c.bf16 %v1086, %v1084
        %v1111 = vpack.c.bf16 %v1089, %v1087
        %v1112 = vpack.c.bf16 %v1090, %v1088
        %v1113 = vpack.c.bf16 %v1093, %v1091
        %v1114 = vpack.c.bf16 %v1094, %v1092
        %v1115 = vpack.c.bf16 %v1097, %v1095
        %v1116 = vpack.c.bf16 %v1098, %v1096
        %v1117 = vpack.c.bf16 %v1101, %v1099
        %v1118 = vpack.c.bf16 %v1102, %v1100
        %v1119 = vld [vmem:[#allocation10] sm:$0xf]
        %v1120 = vld [vmem:[#allocation10 + $0x4] sm:$0xf]
        %v1121 = vld [vmem:[#allocation10 + $0x8] sm:$0xf]
        %v1122 = vld [vmem:[#allocation10 + $0xc] sm:$0xf]
        %v1123 = vld [vmem:[#allocation10 + $0x10] sm:$0xf]
        %v1124 = vld [vmem:[#allocation10 + $0x14] sm:$0xf]
        %v1125 = vld [vmem:[#allocation10 + $0x18] sm:$0xf]
        %v1126 = vld [vmem:[#allocation10 + $0x1c] sm:$0xf]
        %v1127 = vld [vmem:[#allocation10 + $0x20] sm:$0xf]
        %v1128 = vld [vmem:[#allocation10 + $0x24] sm:$0xf]
        %v1129 = vld [vmem:[#allocation10 + $0x28] sm:$0xf]
        %v1130 = vld [vmem:[#allocation10 + $0x2c] sm:$0xf]
        %v1131 = vld [vmem:[#allocation10 + $0x30] sm:$0xf]
        %v1132 = vld [vmem:[#allocation10 + $0x34] sm:$0xf]
        %v1133 = vld [vmem:[#allocation10 + $0x38] sm:$0xf]
        %v1134 = vld [vmem:[#allocation10 + $0x3c] sm:$0xf]
        %v1135 = vld [vmem:[#allocation10 + $0x40] sm:$0xf]
        %v1136 = vld [vmem:[#allocation10 + $0x44] sm:$0xf]
        %v1137 = vld [vmem:[#allocation10 + $0x48] sm:$0xf]
        %v1138 = vld [vmem:[#allocation10 + $0x4c] sm:$0xf]
        %v1139 = vld [vmem:[#allocation10 + $0x50] sm:$0xf]
        %v1140 = vld [vmem:[#allocation10 + $0x54] sm:$0xf]
        %v1141 = vld [vmem:[#allocation10 + $0x58] sm:$0xf]
        %v1142 = vld [vmem:[#allocation10 + $0x5c] sm:$0xf]
        %v1143 = vld [vmem:[#allocation10 + $0x60] sm:$0xf]
        %v1144 = vld [vmem:[#allocation10 + $0x64] sm:$0xf]
        %v1145 = vld [vmem:[#allocation10 + $0x68] sm:$0xf]
        %v1146 = vld [vmem:[#allocation10 + $0x6c] sm:$0xf]
        %v1147 = vld [vmem:[#allocation10 + $0x70] sm:$0xf]
        %v1148 = vld [vmem:[#allocation10 + $0x74] sm:$0xf]
        %v1149 = vld [vmem:[#allocation10 + $0x78] sm:$0xf]
        %v1150 = vld [vmem:[#allocation10 + $0x7c] sm:$0xf]
        %v1151 = vld [vmem:[%s6] sm:$0x1]
        %v1153 = vperm.slane %v1151, 0
        %v1187 = vunpack.c.l.b16 %v1119
        %v1188 = vunpack.c.l.b16 %v1120
        %v1189 = vunpack.c.l.b16 %v1121
        %v1190 = vunpack.c.l.b16 %v1122
        %v1191 = vunpack.c.l.b16 %v1123
        %v1192 = vunpack.c.l.b16 %v1124
        %v1193 = vunpack.c.l.b16 %v1125
        %v1194 = vunpack.c.l.b16 %v1126
        %v1195 = vunpack.c.l.b16 %v1127
        %v1196 = vunpack.c.l.b16 %v1128
        %v1197 = vunpack.c.l.b16 %v1129
        %v1198 = vunpack.c.l.b16 %v1130
        %v1199 = vunpack.c.l.b16 %v1131
        %v1200 = vunpack.c.l.b16 %v1132
        %v1201 = vunpack.c.l.b16 %v1133
        %v1202 = vunpack.c.l.b16 %v1134
        %v1203 = vunpack.c.l.b16 %v1135
        %v1204 = vunpack.c.l.b16 %v1136
        %v1205 = vunpack.c.l.b16 %v1137
        %v1206 = vunpack.c.l.b16 %v1138
        %v1207 = vunpack.c.l.b16 %v1139
        %v1208 = vunpack.c.l.b16 %v1140
        %v1209 = vunpack.c.l.b16 %v1141
        %v1210 = vunpack.c.l.b16 %v1142
        %v1211 = vunpack.c.l.b16 %v1143
        %v1212 = vunpack.c.l.b16 %v1144
        %v1213 = vunpack.c.l.b16 %v1145
        %v1214 = vunpack.c.l.b16 %v1146
        %v1215 = vunpack.c.l.b16 %v1147
        %v1216 = vunpack.c.l.b16 %v1148
        %v1217 = vunpack.c.l.b16 %v1149
        %v1218 = vunpack.c.l.b16 %v1150
        %v1219 = vpack.c.b16 %v1188, %v1187
        %v1220 = vpack.c.b16 %v1190, %v1189
        %v1221 = vpack.c.b16 %v1192, %v1191
        %v1222 = vpack.c.b16 %v1194, %v1193
        %v1223 = vpack.c.b16 %v1196, %v1195
        %v1224 = vpack.c.b16 %v1198, %v1197
        %v1225 = vpack.c.b16 %v1200, %v1199
        %v1226 = vpack.c.b16 %v1202, %v1201
        %v1227 = vpack.c.b16 %v1204, %v1203
        %v1228 = vpack.c.b16 %v1206, %v1205
        %v1229 = vpack.c.b16 %v1208, %v1207
        %v1230 = vpack.c.b16 %v1210, %v1209
        %v1231 = vpack.c.b16 %v1212, %v1211
        %v1232 = vpack.c.b16 %v1214, %v1213
        %v1233 = vpack.c.b16 %v1216, %v1215
        %v1234 = vpack.c.b16 %v1218, %v1217
        %1251 = vmatpush.bf16.msra.mxu0 %v1226
        %1252 = vmatpush.bf16.msra.mxu0 %v1225
        %1253 = vmatpush.bf16.msra.mxu0 %v1224
        %1254 = vmatpush.bf16.msra.mxu0 %v1223
        %1255 = vmatpush.bf16.msra.mxu0 %v1222
        %1256 = vmatpush.bf16.msra.mxu0 %v1221
        %1257 = vmatpush.bf16.msra.mxu0 %v1220
        %1258 = vmatpush.bf16.msra.mxu0 %v1219
        %1259 = vmatmul.bf16.gmra.mxu0 %v1103
        %v1260 = vpop.f32.mrf.mxu0
        %v1261 = vadd.f32 %v1153, %v1260
        %v1262 = vpop.f32.mrf.mxu0
        %v1263 = vadd.f32 %v1153, %v1262
        %1264 = vmatmul.bf16.gmra.mxu0 %v1105
        %v1265 = vpop.f32.mrf.mxu0
        %v1266 = vadd.f32 %v1153, %v1265
        %v1267 = vpop.f32.mrf.mxu0
        %v1268 = vadd.f32 %v1153, %v1267
        %1269 = vmatmul.bf16.gmra.mxu0 %v1107
        %v1270 = vpop.f32.mrf.mxu0
        %v1271 = vadd.f32 %v1153, %v1270
        %v1272 = vpop.f32.mrf.mxu0
        %v1273 = vadd.f32 %v1153, %v1272
        %1274 = vmatmul.bf16.gmra.mxu0 %v1109
        %v1275 = vpop.f32.mrf.mxu0
        %v1276 = vadd.f32 %v1153, %v1275
        %v1277 = vpop.f32.mrf.mxu0
        %v1278 = vadd.f32 %v1153, %v1277
        %1279 = vmatmul.bf16.gmra.mxu0 %v1111
        %v1280 = vpop.f32.mrf.mxu0
        %v1281 = vadd.f32 %v1153, %v1280
        %v1282 = vpop.f32.mrf.mxu0
        %v1283 = vadd.f32 %v1153, %v1282
        %1284 = vmatmul.bf16.gmra.mxu0 %v1113
        %v1285 = vpop.f32.mrf.mxu0
        %v1286 = vadd.f32 %v1153, %v1285
        %v1287 = vpop.f32.mrf.mxu0
        %v1288 = vadd.f32 %v1153, %v1287
        %1289 = vmatmul.bf16.gmra.mxu0 %v1115
        %v1290 = vpop.f32.mrf.mxu0
        %v1291 = vadd.f32 %v1153, %v1290
        %v1292 = vpop.f32.mrf.mxu0
        %v1293 = vadd.f32 %v1153, %v1292
        %1294 = vmatmul.bf16.gmra.mxu0 %v1117
        %v1295 = vpop.f32.mrf.mxu0
        %v1296 = vadd.f32 %v1153, %v1295
        %v1297 = vpop.f32.mrf.mxu0
        %v1298 = vadd.f32 %v1153, %v1297
        %1299 = vdwg.mxu0
        %1300 = vmatpush.bf16.msra.mxu0 %v1234
        %1301 = vmatpush.bf16.msra.mxu0 %v1233
        %1302 = vmatpush.bf16.msra.mxu0 %v1232
        %1303 = vmatpush.bf16.msra.mxu0 %v1231
        %1304 = vmatpush.bf16.msra.mxu0 %v1230
        %1305 = vmatpush.bf16.msra.mxu0 %v1229
        %1306 = vmatpush.bf16.msra.mxu0 %v1228
        %1307 = vmatpush.bf16.msra.mxu0 %v1227
        %1308 = vmatmul.bf16.gmra.mxu0 %v1104
        %v1309 = vpop.f32.mrf.mxu0
        %v1310 = vadd.f32 %v1261, %v1309
        %v1311 = vpop.f32.mrf.mxu0
        %v1312 = vadd.f32 %v1263, %v1311
        %1313 = vmatmul.bf16.gmra.mxu0 %v1106
        %v1314 = vpop.f32.mrf.mxu0
        %v1315 = vadd.f32 %v1266, %v1314
        %v1316 = vpop.f32.mrf.mxu0
        %v1317 = vadd.f32 %v1268, %v1316
        %1318 = vmatmul.bf16.gmra.mxu0 %v1108
        %v1319 = vpop.f32.mrf.mxu0
        %v1320 = vadd.f32 %v1271, %v1319
        %v1321 = vpop.f32.mrf.mxu0
        %v1322 = vadd.f32 %v1273, %v1321
        %1323 = vmatmul.bf16.gmra.mxu0 %v1110
        %v1324 = vpop.f32.mrf.mxu0
        %v1325 = vadd.f32 %v1276, %v1324
        %v1326 = vpop.f32.mrf.mxu0
        %v1327 = vadd.f32 %v1278, %v1326
        %1328 = vmatmul.bf16.gmra.mxu0 %v1112
        %v1329 = vpop.f32.mrf.mxu0
        %v1330 = vadd.f32 %v1281, %v1329
        %v1331 = vpop.f32.mrf.mxu0
        %v1332 = vadd.f32 %v1283, %v1331
        %1333 = vmatmul.bf16.gmra.mxu0 %v1114
        %v1334 = vpop.f32.mrf.mxu0
        %v1335 = vadd.f32 %v1286, %v1334
        %v1336 = vpop.f32.mrf.mxu0
        %v1337 = vadd.f32 %v1288, %v1336
        %1338 = vmatmul.bf16.gmra.mxu0 %v1116
        %v1339 = vpop.f32.mrf.mxu0
        %v1340 = vadd.f32 %v1291, %v1339
        %v1341 = vpop.f32.mrf.mxu0
        %v1342 = vadd.f32 %v1293, %v1341
        %1343 = vmatmul.bf16.gmra.mxu0 %v1118
        %v1344 = vpop.f32.mrf.mxu0
        %v1345 = vadd.f32 %v1296, %v1344
        %v1346 = vpop.f32.mrf.mxu0
        %v1347 = vadd.f32 %v1298, %v1346
        %1348 = vdwg.mxu0
        %1349 = vst [vmem:[%s362] sm:$0xff] %v1310
        %1350 = vst [vmem:[%s362 + $0x8] sm:$0xff] %v1312
        %1351 = vst [vmem:[%s362 + $0x10] sm:$0xff] %v1315
        %1352 = vst [vmem:[%s362 + $0x18] sm:$0xff] %v1317
        %1353 = vst [vmem:[%s362 + $0x20] sm:$0xff] %v1320
        %1354 = vst [vmem:[%s362 + $0x28] sm:$0xff] %v1322
        %1355 = vst [vmem:[%s362 + $0x30] sm:$0xff] %v1325
        %1356 = vst [vmem:[%s362 + $0x38] sm:$0xff] %v1327
        %1357 = vst [vmem:[%s362 + $0x40] sm:$0xff] %v1330
        %1358 = vst [vmem:[%s362 + $0x48] sm:$0xff] %v1332
        %1359 = vst [vmem:[%s362 + $0x50] sm:$0xff] %v1335
        %1360 = vst [vmem:[%s362 + $0x58] sm:$0xff] %v1337
        %1361 = vst [vmem:[%s362 + $0x60] sm:$0xff] %v1340
        %1362 = vst [vmem:[%s362 + $0x68] sm:$0xff] %v1342
        %1363 = vst [vmem:[%s362 + $0x70] sm:$0xff] %v1345
        %1364 = vst [vmem:[%s362 + $0x78] sm:$0xff] %v1347
        %s1365 = sand.u32 %s186, 1
        %s1366 = scalar_lea.sflag [#allocation4], %s1365
        %s1367 = sand.u32 %s186, 1
        %s1368 = smul.addr %s1367, 128
        %s1369 = scalar_lea.vmem [#allocation11], %s1368
        // Predicated region
        $region69: #{tpu_custom_call.1} parent=47 // pred_check
          %p1370 = pneg %p196
        $region70: #{tpu_custom_call.1} parent=47 // pred_check_branch
          %1372 = sbr.rel (%p1370) target = $region72
        $region71: #{tpu_custom_call.1} parent=47 // pred_region
          %s1373 = smul.u32 16, %s26
          %1375 = vsyncadd %s1366, 0
          %s1376 = smul.addr %s1373, 8
          %s1377 = scalar_lea.hbm %s7, %s1376
          %s1378 = sshll.u32 %s1369, 4
          %s1379 = int_to_ptr.vmem [resolvable:$true] %s1378
          %s1380 = sshll.u32 %s1377, 4
          %s1381 = int_to_ptr.hbm [resolvable:$true] %s1380
          %1386 = dma.vmem_to_hbm [thread:$0]  %s1379, 2048, %s1381, %s1366, 128, 128, 8
        $region72: #{tpu_custom_call.1} parent=47 // pred_fallthru
          _
      $region48: #{tpu_custom_call.1} parent=5 // pred_fallthru
        _
      %p1387 = scmp.le.s32.totalorder 2, %s21
      // Predicated region
      $region73: #{tpu_custom_call.1} parent=5 // pred_check
        %p1388 = pneg %p1387
      $region74: #{tpu_custom_call.1} parent=5 // pred_check_branch
        %1390 = sbr.rel (%p1388) target = $region76
      $region75: #{tpu_custom_call.1} parent=5 // pred_region
        %s1391 = ssub.s32 %s21, 2
        // Predicated region
        $region77: #{tpu_custom_call.1} parent=75 // pred_check
          %p1392 = pneg %p202
        $region78: #{tpu_custom_call.1} parent=75 // pred_check_branch
          %1394 = sbr.rel (%p1392) target = $region80
        $region79: #{tpu_custom_call.1} parent=75 // pred_region
          %s1395 = sand.u32 %s187, 1
          %s1396 = scalar_lea.sflag [#allocation4], %s1395
          %s1397 = sand.u32 %s187, 1
          %s1398 = smul.addr %s1397, 128
          %s1399 = scalar_lea.vmem [#allocation11], %s1398
          %1401 = dma.done %s1396, 2048
        $region80: #{tpu_custom_call.1} parent=75 // pred_fallthru
          _
      $region76: #{tpu_custom_call.1} parent=5 // pred_fallthru
        _
    $region6: #{tpu_custom_call.1} parent=1 // loop_footer
      %s25 = sadd.s32 1, %s21
    $region7: #{tpu_custom_call.1} parent=1 // loop_footer_branch
      %20 = sbr.rel target = $region3
    $region8: #{tpu_custom_call.1} parent=1 // loop_exit
      _
    %1402 = vsyncpa [#allocation3], 1
    %s1403 = scalar_lea.sflag [#allocation3], 1
    %1404 = vsyncpa %s1403, 1
    %1405 = vsyncpa [#allocation6], 1
    %1406 = vsyncpa [#allocation9], 1
    %1407 = vsyncpa [#allocation4], 1
    %s1408 = scalar_lea.sflag [#allocation4], 1
    %1409 = vsyncpa %s1408, 1

</llo_original>
